<compile_context>
chip_gen: v7x
topology: tpu7x:2x2x1
jax: 0.10.0
libtpu: 0.0.40
codegen_flags: <defaults>
</compile_context>

<pallas_src>
import math
from functools import partial

import jax
import jax.numpy as jnp
from jax.experimental import pallas as pl
from jax.experimental.pallas import tpu as pltpu


def _round_up(v, m):
    return (v + m - 1) // m * m


def _sphere_margin_kernel(xn_ref, xnorm_ref, wt_ref, lbl_ref, out_ref, *,
                          m, cur_lambda, inv_one_plus_lambda, k_thresholds,
                          tile_c):
    j = pl.program_id(0)                       # class-tile index (OUTER grid axis)

    # cos_theta tile: unit-norm rows @ unit-norm columns (1/||w|| folded into wt).
    cos = jnp.dot(xn_ref[...], wt_ref[...],
                  preferred_element_type=jnp.float32)            # [TB, TC]  MXU
    c = jnp.clip(cos, -1.0, 1.0)

    # --- label-column extraction: margin math only touches one lane per row ---
    tb, tc = c.shape
    col = jax.lax.broadcasted_iota(jnp.int32, (tb, tc), 1) + j * tile_c
    mask = col == lbl_ref[...]                                   # one-hot tile
    c_lab = jnp.sum(jnp.where(mask, c, 0.0), axis=1, keepdims=True)   # [TB,1] XLU

    # cos(m*theta) via Chebyshev polynomial on the [TB,1] label column; m static.
    if m == 1:
        cos_m = c_lab
    elif m == 2:
        cos_m = 2.0 * c_lab * c_lab - 1.0
    elif m == 3:
        cos_m = (4.0 * c_lab * c_lab - 3.0) * c_lab
    else:  # m == 4
        c2 = c_lab * c_lab
        cos_m = 8.0 * c2 * (c2 - 1.0) + 1.0

    # k = floor(m*acos(c)/pi) == #{ t in thresholds : c <= t } (acos monotone).
    k = jnp.zeros_like(c_lab)
    for t in k_thresholds:
        k = k + (c_lab <= t).astype(jnp.float32)
    sign = 1.0 - 2.0 * jnp.mod(k, 2.0)                           # (-1)^k
    phi_hat = (cur_lambda * c_lab + sign * cos_m - 2.0 * k) * inv_one_plus_lambda

    # Splice the margin column back and scale by ||x||.
    out = jnp.where(mask, phi_hat, c) * xnorm_ref[...]
    out_ref[...] = out.astype(out_ref.dtype)


def prepare_weight(weight, *, tile_c=1024, mxu_dtype=jnp.bfloat16):
    """Transpose weight to [D, C], fold 1/||w_row|| into the columns, pad the
    class dim to a multiple of the class tile, and cast to the MXU stream dtype.

    The result only changes when the weight changes — cache it across steps to
    avoid an extra HBM transpose/pad pass per forward call.
    Returns (w_t_padded, C_original, TC)."""
    C, D = weight.shape
    w32 = weight.astype(jnp.float32)
    inv_wn = 1.0 / jnp.maximum(
        jnp.sqrt(jnp.sum(w32 * w32, axis=1, keepdims=True)), 1e-12)     # [C,1]
    w_t = (w32 * inv_wn).T                                              # [D,C] unit cols
    TC = min(tile_c, _round_up(C, 128))
    C_pad = _round_up(C, TC)
    if C_pad != C:
        w_t = jnp.pad(w_t, ((0, 0), (0, C_pad - C)))
    return w_t.astype(mxu_dtype), C, TC


def sphere_margin_product(x, weight, label, *, m=4, base=1000.0, gamma=1e-4,
                          power=2, lambda_min=5.0, iter_count=1,
                          tile_b=256, tile_c=1024,
                          mxu_dtype=jnp.bfloat16, out_dtype=jnp.float32,
                          prepared_weight=None, vmem_limit_bytes=None):
    """One forward pass of SphereMarginProduct (iter_count = self.iter after +1).

    x:      [B, D] float
    weight: [C, D] float (nn.Linear convention); ignored if prepared_weight given
    label:  [B] int
    prepared_weight: optional cached result of prepare_weight(weight, ...).
    mxu_dtype=bf16 (default) halves weight HBM traffic and hits native MXU rate;
    use jnp.float32 for a tighter-precision (slower) path.
    """
    assert m in (1, 2, 3, 4)
    cur_lambda = max(lambda_min, base * (1.0 + gamma * iter_count) ** (-power))
    k_thresholds = tuple(math.cos(jj * math.pi / m) for jj in range(1, m + 1))

    if prepared_weight is None:
        prepared_weight = prepare_weight(weight, tile_c=tile_c, mxu_dtype=mxu_dtype)
    w_t, C, TC = prepared_weight
    D, C_pad = w_t.shape

    B, D2 = x.shape
    assert D == D2

    # Hoisted x-normalization: tiny O(B*D) XLA op; frees the kernel of scratch so
    # both grid axes can be "parallel".  xn is passed already in mxu_dtype.
    x32 = x.astype(jnp.float32)
    xnorm = jnp.sqrt(jnp.sum(x32 * x32, axis=1, keepdims=True))          # [B,1] = ||x||
    xn = (x32 / jnp.maximum(xnorm, 1e-12)).astype(mxu_dtype)             # [B,D]

    TB = min(tile_b, _round_up(B, 8))
    B_pad = _round_up(B, TB)
    if B_pad != B:
        xn = jnp.pad(xn, ((0, B_pad - B), (0, 0)))
        xnorm = jnp.pad(xnorm, ((0, B_pad - B), (0, 0)))

    lbl = label.astype(jnp.int32).reshape(B, 1)
    if B_pad != B:
        lbl = jnp.pad(lbl, ((0, B_pad - B), (0, 0)), constant_values=-1)

    # Class tiles OUTER, batch tiles inner: the weight tile's block index is
    # constant across the inner axis, so each [D, TC] tile is DMA'd exactly once.
    grid = (C_pad // TC, B_pad // TB)

    kernel = partial(_sphere_margin_kernel,
                     m=m,
                     cur_lambda=float(cur_lambda),
                     inv_one_plus_lambda=1.0 / (1.0 + float(cur_lambda)),
                     k_thresholds=k_thresholds,
                     tile_c=TC)

    cp_kwargs = dict(dimension_semantics=("parallel", "parallel"))
    if vmem_limit_bytes is not None:
        cp_kwargs["vmem_limit_bytes"] = vmem_limit_bytes

    out = pl.pallas_call(
        kernel,
        out_shape=jax.ShapeDtypeStruct((B_pad, C_pad), out_dtype),
        grid=grid,
        in_specs=[
            pl.BlockSpec((TB, D), lambda j, i: (i, 0)),   # normalized x (mxu_dtype)
            pl.BlockSpec((TB, 1), lambda j, i: (i, 0)),   # ||x||      (f32)
            pl.BlockSpec((D, TC), lambda j, i: (0, j)),   # unit-norm weight^T tile
            pl.BlockSpec((TB, 1), lambda j, i: (i, 0)),   # labels
        ],
        out_specs=pl.BlockSpec((TB, TC), lambda j, i: (i, j)),
        compiler_params=pltpu.CompilerParams(**cp_kwargs),
    )(xn, xnorm, w_t, lbl)

    return out[:B, :C]


def _reference(x, weight, label, m, cur_lambda):
    """Pure-JAX reference of the intended SphereFace forward."""
    xn = x / jnp.maximum(jnp.linalg.norm(x, axis=1, keepdims=True), 1e-12)
    wn = weight / jnp.maximum(jnp.linalg.norm(weight, axis=1, keepdims=True), 1e-12)
    cos = jnp.clip(xn @ wn.T, -1.0, 1.0)
    formulas = {1: lambda c: c, 2: lambda c: 2 * c ** 2 - 1,
                3: lambda c: 4 * c ** 3 - 3 * c,
                4: lambda c: 8 * c ** 4 - 8 * c ** 2 + 1}
    cos_m = formulas[m](cos)
    theta = jnp.arccos(cos)
    k = jnp.floor(m * theta / math.pi)
    sign = jnp.where(jnp.mod(k, 2.0) == 0, 1.0, -1.0)
    phi = sign * cos_m - 2.0 * k
    phi_hat = (cur_lambda * cos + phi) / (1.0 + cur_lambda)
    one_hot = jax.nn.one_hot(label, weight.shape[0], dtype=cos.dtype)
    out = one_hot * phi_hat + (1.0 - one_hot) * cos
    return out * jnp.linalg.norm(x, axis=1, keepdims=True), cos


if __name__ == "__main__":
    # Small, module-consistent shapes: batch=8, in_feature=32, out_feature=16
    B, in_feature, out_feature = 8, 32, 16
    m, iter_count = 4, 1

    key = jax.random.PRNGKey(0)
    kx, kw, kl = jax.random.split(key, 3)

    x = jax.random.normal(kx, (B, in_feature), dtype=jnp.float32)

    # Deterministic xavier_uniform_-style init for weight [out_feature, in_feature]
    bound = math.sqrt(6.0 / (in_feature + out_feature))
    weight = jax.random.uniform(kw, (out_feature, in_feature),
                                dtype=jnp.float32, minval=-bound, maxval=bound)

    label = jax.random.randint(kl, (B,), 0, out_feature, dtype=jnp.int32)

    cur_lambda = max(5.0, 1000.0 * (1.0 + 1e-4 * iter_count) ** (-2))
    ref, cos_ref = _reference(x, weight, label, m, cur_lambda)

    def near_mask(radius):
        near = jnp.zeros_like(cos_ref, dtype=bool)
        for t in (math.cos(j * math.pi / m) for j in range(1, m + 1)):
            near = near | (jnp.abs(cos_ref - t) < radius)
        return near

    # 1) default bf16 weight/MXU stream
    out_bf16 = sphere_margin_product(x, weight, label, m=m, iter_count=iter_count)
    out_bf16 = jax.block_until_ready(out_bf16)
    assert out_bf16.shape == (B, out_feature)
    assert bool(jnp.all(jnp.isfinite(out_bf16)))
    err = jnp.where(near_mask(5e-2), 0.0, jnp.abs(out_bf16 - ref))
    assert float(jnp.max(err)) < 1e-1, float(jnp.max(err))

    # 2) f32 MXU path (tighter tolerance; masks k-boundary elements where matmul
    #    rounding can legitimately flip floor(m*theta/pi))
    out_f32 = sphere_margin_product(x, weight, label, m=m, iter_count=iter_count,
                                    mxu_dtype=jnp.float32)
    out_f32 = jax.block_until_ready(out_f32)
    err = jnp.where(near_mask(1e-2), 0.0, jnp.abs(out_f32 - ref))
    assert float(jnp.max(err)) < 2e-2, float(jnp.max(err))

    print("KERNEL_OK")
</pallas_src>

<mosaic_0001>
module attributes {stable_mosaic.version = 11 : i64} {
  func.func @_sphere_margin_kernel(%arg0: i32, %arg1: i32, %arg2: memref<8x32xbf16, #tpu.memory_space<vmem>>, %arg3: memref<8x1xf32, #tpu.memory_space<vmem>>, %arg4: memref<32x128xbf16, #tpu.memory_space<vmem>>, %arg5: memref<8x1xi32, #tpu.memory_space<vmem>>, %arg6: memref<8x128xf32, #tpu.memory_space<vmem>>) attributes {dimension_semantics = [#tpu.dimension_semantics<parallel>, #tpu.dimension_semantics<parallel>], iteration_bounds = array<i64: 1, 1>, scalar_prefetch = 0 : i64, scratch_operands = 0 : i64, tpu.core_type = #tpu.core_type<tc>, window_params = [{transform_indices = @transform_0, window_bounds = array<i64: 8, 32>}, {transform_indices = @transform_1, window_bounds = array<i64: 8, 1>}, {transform_indices = @transform_2, window_bounds = array<i64: 32, 128>}, {transform_indices = @transform_3, window_bounds = array<i64: 8, 1>}, {transform_indices = @transform_4, window_bounds = array<i64: 8, 128>}]} {
    %c0 = arith.constant 0 : index
    %c0_0 = arith.constant 0 : index
    %0 = vector.load %arg2[%c0, %c0_0] : memref<8x32xbf16, #tpu.memory_space<vmem>>, vector<8x32xbf16>
    %c0_1 = arith.constant 0 : index
    %c0_2 = arith.constant 0 : index
    %1 = vector.load %arg4[%c0_1, %c0_2] : memref<32x128xbf16, #tpu.memory_space<vmem>>, vector<32x128xbf16>
    %cst = arith.constant dense<0.000000e+00> : vector<8x128xf32>
    %2 = tpu.matmul %0, %1, %cst {dimension_numbers = #tpu.dot_dimension_numbers<[1], [0], [0], [1], [0, 0, 1, 1], [], []>} : vector<8x32xbf16>, vector<32x128xbf16>, vector<8x128xf32> -> vector<8x128xf32>
    %cst_3 = arith.constant -1.000000e+00 : f32
    %cst_4 = arith.constant 1.000000e+00 : f32
    %3 = vector.broadcast %cst_3 : f32 to vector<8x128xf32>
    %4 = arith.maximumf %3, %2 : vector<8x128xf32>
    %5 = vector.broadcast %cst_4 : f32 to vector<8x128xf32>
    %6 = arith.minimumf %5, %4 : vector<8x128xf32>
    %7 = tpu.iota {dimensions = array<i32: 1>} : vector<8x128xi32>
    %c128_i32 = arith.constant 128 : i32
    %8 = arith.muli %arg0, %c128_i32 : i32
    %9 = vector.broadcast %8 : i32 to vector<8x128xi32>
    %10 = arith.addi %7, %9 : vector<8x128xi32>
    %c0_5 = arith.constant 0 : index
    %c0_6 = arith.constant 0 : index
    %11 = vector.load %arg5[%c0_5, %c0_6] : memref<8x1xi32, #tpu.memory_space<vmem>>, vector<8x1xi32>
    %12 = vector.broadcast %11 : vector<8x1xi32> to vector<8x128xi32>
    %13 = arith.cmpi eq, %10, %12 : vector<8x128xi32>
    %cst_7 = arith.constant 0.000000e+00 : f32
    %14 = vector.broadcast %cst_7 : f32 to vector<8x128xf32>
    %15 = arith.select %13, %6, %14 : vector<8x128xi1>, vector<8x128xf32>
    %cst_8 = arith.constant dense<0.000000e+00> : vector<8xf32>
    %16 = vector.multi_reduction <add>, %15, %cst_8 [1] : vector<8x128xf32> to vector<8xf32>
    %17 = vector.shape_cast %16 : vector<8xf32> to vector<8x1xf32>
    %18 = arith.mulf %17, %17 : vector<8x1xf32>
    %cst_9 = arith.constant 8.000000e+00 : f32
    %19 = vector.broadcast %cst_9 : f32 to vector<8x1xf32>
    %20 = arith.mulf %19, %18 : vector<8x1xf32>
    %cst_10 = arith.constant 1.000000e+00 : f32
    %21 = vector.broadcast %cst_10 : f32 to vector<8x1xf32>
    %22 = arith.subf %18, %21 : vector<8x1xf32>
    %23 = arith.mulf %20, %22 : vector<8x1xf32>
    %cst_11 = arith.constant 1.000000e+00 : f32
    %24 = vector.broadcast %cst_11 : f32 to vector<8x1xf32>
    %25 = arith.addf %23, %24 : vector<8x1xf32>
    %cst_12 = arith.constant 0.000000e+00 : f32
    %26 = vector.broadcast %cst_12 : f32 to vector<8x1xf32>
    %cst_13 = arith.constant 0.707106769 : f32
    %27 = vector.broadcast %cst_13 : f32 to vector<8x1xf32>
    %28 = arith.cmpf ole, %17, %27 : vector<8x1xf32>
    %29 = arith.extui %28 : vector<8x1xi1> to vector<8x1xi32>
    %30 = arith.sitofp %29 : vector<8x1xi32> to vector<8x1xf32>
    %31 = arith.addf %26, %30 : vector<8x1xf32>
    %cst_14 = arith.constant 6.12323426E-17 : f32
    %32 = vector.broadcast %cst_14 : f32 to vector<8x1xf32>
    %33 = arith.cmpf ole, %17, %32 : vector<8x1xf32>
    %34 = arith.extui %33 : vector<8x1xi1> to vector<8x1xi32>
    %35 = arith.sitofp %34 : vector<8x1xi32> to vector<8x1xf32>
    %36 = arith.addf %31, %35 : vector<8x1xf32>
    %cst_15 = arith.constant -0.707106769 : f32
    %37 = vector.broadcast %cst_15 : f32 to vector<8x1xf32>
    %38 = arith.cmpf ole, %17, %37 : vector<8x1xf32>
    %39 = arith.extui %38 : vector<8x1xi1> to vector<8x1xi32>
    %40 = arith.sitofp %39 : vector<8x1xi32> to vector<8x1xf32>
    %41 = arith.addf %36, %40 : vector<8x1xf32>
    %cst_16 = arith.constant -1.000000e+00 : f32
    %42 = vector.broadcast %cst_16 : f32 to vector<8x1xf32>
    %43 = arith.cmpf ole, %17, %42 : vector<8x1xf32>
    %44 = arith.extui %43 : vector<8x1xi1> to vector<8x1xi32>
    %45 = arith.sitofp %44 : vector<8x1xi32> to vector<8x1xf32>
    %46 = arith.addf %41, %45 : vector<8x1xf32>
    %cst_17 = arith.constant 2.000000e+00 : f32
    %47 = vector.broadcast %cst_17 : f32 to vector<8x1xf32>
    %48 = arith.remf %46, %47 : vector<8x1xf32>
    %cst_18 = arith.constant 0.000000e+00 : f32
    %49 = vector.broadcast %cst_18 : f32 to vector<8x1xf32>
    %50 = arith.cmpf one, %48, %49 : vector<8x1xf32>
    %cst_19 = arith.constant 0.000000e+00 : f32
    %51 = vector.broadcast %cst_19 : f32 to vector<8x1xf32>
    %52 = arith.cmpf olt, %48, %51 : vector<8x1xf32>
    %cst_20 = arith.constant 0.000000e+00 : f32
    %53 = arith.cmpf olt, %cst_17, %cst_20 : f32
    %54 = vector.broadcast %53 : i1 to vector<8x1xi1>
    %55 = vector.broadcast %54 : vector<8x1xi1> to vector<8x1xi1>
    %56 = arith.xori %52, %55 : vector<8x1xi1>
    %57 = arith.andi %56, %50 : vector<8x1xi1>
    %58 = vector.broadcast %cst_17 : f32 to vector<8x1xf32>
    %59 = arith.addf %48, %58 : vector<8x1xf32>
    %60 = arith.select %57, %59, %48 : vector<8x1xi1>, vector<8x1xf32>
    %cst_21 = arith.constant 2.000000e+00 : f32
    %61 = vector.broadcast %cst_21 : f32 to vector<8x1xf32>
    %62 = arith.mulf %61, %60 : vector<8x1xf32>
    %cst_22 = arith.constant 1.000000e+00 : f32
    %63 = vector.broadcast %cst_22 : f32 to vector<8x1xf32>
    %64 = arith.subf %63, %62 : vector<8x1xf32>
    %cst_23 = arith.constant 999.800048 : f32
    %65 = vector.broadcast %cst_23 : f32 to vector<8x1xf32>
    %66 = arith.mulf %65, %17 : vector<8x1xf32>
    %67 = arith.mulf %64, %25 : vector<8x1xf32>
    %68 = arith.addf %66, %67 : vector<8x1xf32>
    %cst_24 = arith.constant 2.000000e+00 : f32
    %69 = vector.broadcast %cst_24 : f32 to vector<8x1xf32>
    %70 = arith.mulf %69, %46 : vector<8x1xf32>
    %71 = arith.subf %68, %70 : vector<8x1xf32>
    %cst_25 = arith.constant 9.99200623E-4 : f32
    %72 = vector.broadcast %cst_25 : f32 to vector<8x1xf32>
    %73 = arith.mulf %71, %72 : vector<8x1xf32>
    %74 = vector.shape_cast %73 : vector<8x1xf32> to vector<8x1xf32>
    %75 = vector.broadcast %74 : vector<8x1xf32> to vector<8x128xf32>
    %76 = arith.select %13, %75, %6 : vector<8x128xi1>, vector<8x128xf32>
    %c0_26 = arith.constant 0 : index
    %c0_27 = arith.constant 0 : index
    %77 = vector.load %arg3[%c0_26, %c0_27] : memref<8x1xf32, #tpu.memory_space<vmem>>, vector<8x1xf32>
    %78 = vector.broadcast %77 : vector<8x1xf32> to vector<8x128xf32>
    %79 = arith.mulf %76, %78 : vector<8x128xf32>
    %c0_28 = arith.constant 0 : index
    %c0_29 = arith.constant 0 : index
    %80 = vector.load %arg6[%c0_28, %c0_29] : memref<8x128xf32, #tpu.memory_space<vmem>>, vector<8x128xf32>
    tpu.vector_store %arg6[%c0_28, %c0_29], %79 {strides = array<i32>} : memref<8x128xf32, #tpu.memory_space<vmem>>, vector<8x128xf32>,
    return
  }
  func.func @transform_0(%arg0: i32, %arg1: i32) -> (i32, i32) {
    %c0_i32 = arith.constant 0 : i32
    %c0_i32_0 = arith.constant 0 : i32
    return %arg1, %c0_i32 : i32, i32
  }
  func.func @transform_1(%arg0: i32, %arg1: i32) -> (i32, i32) {
    %c0_i32 = arith.constant 0 : i32
    %c0_i32_0 = arith.constant 0 : i32
    return %arg1, %c0_i32 : i32, i32
  }
  func.func @transform_2(%arg0: i32, %arg1: i32) -> (i32, i32) {
    %c0_i32 = arith.constant 0 : i32
    %c0_i32_0 = arith.constant 0 : i32
    return %c0_i32, %arg0 : i32, i32
  }
  func.func @transform_3(%arg0: i32, %arg1: i32) -> (i32, i32) {
    %c0_i32 = arith.constant 0 : i32
    %c0_i32_0 = arith.constant 0 : i32
    return %arg1, %c0_i32 : i32, i32
  }
  func.func @transform_4(%arg0: i32, %arg1: i32) -> (i32, i32) {
    %c0_i32 = arith.constant 0 : i32
    return %arg1, %arg0 : i32, i32
  }
}

</mosaic_0001>

<llo_original>
// kernel: tpu_custom_call.1
$region0: #{tpu_custom_call.1}
  #allocation0 [shape = 'u32[]', space=smem, size = 0x4, offset = 0x4, fixed_abs, tag = 'smem constant byte address 0x4 - core index']
  #allocation1 [shape = 'u32[144,128]{1,0:T(1,128)}', space=vmem, size = 0x12000, scoped, tag = 'internal scratch']
  %s0 = inlined_call_operand.vmem [shape: bf16[8,32], index: 0, kind: input, shape index: {}]
  %s1 = inlined_call_operand.vmem [shape: f32[8,1], index: 1, kind: input, shape index: {}]
  %s2 = inlined_call_operand.vmem [shape: bf16[32,128], index: 2, kind: input, shape index: {}]
  %s3 = inlined_call_operand.vmem [shape: s32[8,1], index: 3, kind: input, shape index: {}]
  %s4 = inlined_call_operand.hbm [shape: f32[8,128], index: 4, kind: output, shape index: {}]
  %s5 = sld [smem:[#allocation0]]
  $region26: #{tpu_custom_call.1} parent=0
    _
  %s7 = ssub.s32 1, %s5
  %s8 = scalar_select 0, %s7, %s5
  $region1: #{tpu_custom_call.1} parent=0
    #allocation2 [shape = 'u8[4096]{0}', space=vmem, size = 0x1000, scoped, tag = 'output window, operand 0, single buffered']
    #allocation3 [shape = 's32[1]{0}', space=sflag, size = 0x4, scoped, tag = 'scoped memory for tpu_custom_call.1']
    %9 = vsyncpa [#allocation3], 0
    // Predicated region
    $region2: #{tpu_custom_call.1} parent=1 // pred_check
      _
    $region3: #{tpu_custom_call.1} parent=1 // pred_check_branch
      %11 = sbr.rel (0) target = $region5
    $region4: #{tpu_custom_call.1} parent=1 // pred_region
      _
    $region5: #{tpu_custom_call.1} parent=1 // pred_fallthru
      _
    // Predicated region
    $region6: #{tpu_custom_call.1} parent=1 // pred_check
      _
    $region7: #{tpu_custom_call.1} parent=1 // pred_check_branch
      %13 = sbr.rel (0) target = $region9
    $region8: #{tpu_custom_call.1} parent=1 // pred_region
      _
    $region9: #{tpu_custom_call.1} parent=1 // pred_fallthru
      _
    // Predicated region
    $region10: #{tpu_custom_call.1} parent=1 // pred_check
      _
    $region11: #{tpu_custom_call.1} parent=1 // pred_check_branch
      %15 = sbr.rel (0) target = $region13
    $region12: #{tpu_custom_call.1} parent=1 // pred_region
      _
    $region13: #{tpu_custom_call.1} parent=1 // pred_fallthru
      _
    // Predicated region
    $region14: #{tpu_custom_call.1} parent=1 // pred_check
      _
    $region15: #{tpu_custom_call.1} parent=1 // pred_check_branch
      %17 = sbr.rel (0) target = $region17
    $region16: #{tpu_custom_call.1} parent=1 // pred_region
      _
    $region17: #{tpu_custom_call.1} parent=1 // pred_fallthru
      _
    %v19 = vld [vmem:[%s0] sm:$0xf]
    %v20 = vld [vmem:[%s2] sm:$0xf]
    %v21 = vld [vmem:[%s2 + $0x4] sm:$0xf]
    %v22 = vld [vmem:[%s2 + $0x8] sm:$0xf]
    %v23 = vld [vmem:[%s2 + $0xc] sm:$0xf]
    %v28 = vunpack.c.l.b16 %v20
    %v29 = vunpack.c.l.b16 %v21
    %v30 = vunpack.c.l.b16 %v22
    %v31 = vunpack.c.l.b16 %v23
    %v32 = vpack.c.b16 %v29, %v28
    %v33 = vpack.c.b16 %v31, %v30
    %vm36 = vcmask 261120
    %v38 = vsel %vm36, %v19, 0
    %40 = vmatprep.subr.bf16.mxu0 0
    %41 = vmatpush1.bf16.msra.mxu0 %v32
    %42 = vmatprep.subr.bf16.mxu0 0
    %43 = vmatpush1.bf16.msra.mxu0 %v33
    %44 = vmatprep.subr.bf16.mxu0 0
    %45 = vmatpush1.bf16.msra.mxu0 0
    %46 = vmatprep.subr.bf16.mxu0 0
    %47 = vmatpush1.bf16.msra.mxu0 0
    %48 = vmatprep.subr.bf16.mxu0 0
    %49 = vmatpush1.bf16.msra.mxu0 0
    %50 = vmatprep.subr.bf16.mxu0 0
    %51 = vmatpush1.bf16.msra.mxu0 0
    %52 = vmatprep.subr.bf16.mxu0 0
    %53 = vmatpush1.bf16.msra.mxu0 0
    %54 = vmatprep.subr.bf16.mxu0 0
    %55 = vmatpush1.bf16.msra.mxu0 0
    %56 = vmatprep.subr.bf16.mxu0 0
    %57 = vmatpush1.bf16.msra.mxu0 0
    %58 = vmatprep.subr.bf16.mxu0 0
    %59 = vmatpush1.bf16.msra.mxu0 0
    %60 = vmatprep.subr.bf16.mxu0 0
    %61 = vmatpush1.bf16.msra.mxu0 0
    %62 = vmatprep.subr.bf16.mxu0 0
    %63 = vmatpush1.bf16.msra.mxu0 0
    %64 = vmatprep.subr.bf16.mxu0 0
    %65 = vmatpush1.bf16.msra.mxu0 0
    %66 = vmatprep.subr.bf16.mxu0 0
    %67 = vmatpush1.bf16.msra.mxu0 0
    %68 = vmatprep.subr.bf16.mxu0 0
    %69 = vmatpush1.bf16.msra.mxu0 0
    %70 = vmatprep.subr.bf16.mxu0 0
    %71 = vmatpush1.bf16.msra.mxu0 0
    %72 = vmatprep.mubr.bf16.mxu0 0
    %73 = vmatmul.mubr.bf16.gmra.mrb[0].mxu0 %v38
    %v74 = vpop.f32.mrb[0].mxu0
    %v75 = vadd.f32 0.0, %v74
    %v76 = vpop.f32.mrb[0].mxu0
    %v77 = vpop.f32.mrb[0].mxu0
    %v78 = vpop.f32.mrb[0].mxu0
    %79 = vdwg.mxu0
    %v80 = vmax.f32 %v75, -1.0
    %v81 = vmin.f32 %v80, 1.0
    %v82 = vlaneseq
    %v83 = vand.u32 %v82, 127
    %s84 = smul.u32 0, 128
    %v85 = vstv %s84
    %v86 = vadd.s32 %v83, %v85
    %v87 = vld [vmem:[%s3] sm:$0xff]
    %88 = vset.pattern.permute.xlu0 0
    %89 = vperm.xlu0 %88, %v87
    %v90 = vpop.permute.xlu0 %89
    %vm91 = vcmp.eq.s32.totalorder %v86, %v90
    %v92 = vsel %vm91, %v81, 0.0
    %93 = vadd.xlane.f32.xlu0 %v92
    %v94 = vpop.xlane.xlu0 %93
    %v95 = vmul.f32 %v94, %v94
    %v96 = vmul.f32 %v95, 8.0
    %v97 = vsub.f32 %v95, 1.0
    %v98 = vmul.f32 %v96, %v97
    %v99 = vadd.f32 %v98, 1.0
    %vm100 = vcmp.le.f32.partialorder %v94, 0.70710677
    %v101 = vsel %vm100, 1, 0
    %v102 = vcvt.s32.f32 %v101
    %v103 = vadd.f32 %v102, 0.0
    %vm104 = vcmp.le.f32.partialorder %v94, 6.123234e-17
    %v105 = vsel %vm104, 1, 0
    %v106 = vcvt.s32.f32 %v105
    %v107 = vadd.f32 %v103, %v106
    %vm108 = vcmp.le.f32.partialorder %v94, -0.70710677
    %v109 = vsel %vm108, 1, 0
    %v110 = vcvt.s32.f32 %v109
    %v111 = vadd.f32 %v107, %v110
    %vm112 = vcmp.le.f32.partialorder %v94, -1.0
    %v113 = vsel %vm112, 1, 0
    %v114 = vcvt.s32.f32 %v113
    %v115 = vadd.f32 %v111, %v114
    %v116 = vand.u32 2147483647, %v115
    %v117 = vrcp.pop 2.0
    %v118 = vmul.f32 %v116, %v117
    %v119 = vfloor.f32 %v118
    %v120 = vmul.f32 %v119, 2.0
    %v121 = vsub.f32 %v116, %v120
    %vm122 = vcmp.eq.f32.partialorder %v121, 2.0
    %v123 = vsel %vm122, 0.0, %v121
    %v124 = vand.u32 2147483647, %v123
    %v125 = vand.u32 %v115, 2147483648
    %v126 = vor.u32 %v124, %v125
    %vm127 = vcmp.ne.f32.partialorder %v126, 0.0
    %vm128 = vcmp.lt.f32.partialorder %v126, 0.0
    %vm129 = vmand %vm128, %vm127
    %v130 = vadd.f32 %v126, 2.0
    %v131 = vsel %vm129, %v130, %v126
    %v132 = vmul.f32 %v131, 2.0
    %v133 = vsub.f32 1.0, %v132
    %v134 = vmul.f32 %v94, 999.80005
    %v135 = vmul.f32 %v133, %v99
    %v136 = vadd.f32 %v134, %v135
    %v137 = vmul.f32 %v115, 2.0
    %v138 = vsub.f32 %v136, %v137
    %v139 = vmul.f32 %v138, 0.0009992006
    %v140 = vsel %vm91, %v139, %v81
    %v141 = vld [vmem:[%s1] sm:$0xff]
    %143 = vset.pattern.permute.xlu0 0
    %144 = vperm.xlu0 %143, %v141
    %v145 = vpop.permute.xlu0 %144
    %v147 = vmul.f32 %v140, %v145
    %148 = vst [vmem:[#allocation2] sm:$0xff] %v147
    // Predicated region
    $region18: #{tpu_custom_call.1} parent=1 // pred_check
      _
    $region19: #{tpu_custom_call.1} parent=1 // pred_check_branch
      %150 = sbr.rel (0) target = $region21
    $region20: #{tpu_custom_call.1} parent=1 // pred_region
      %s152 = ssub.s32 128, 128
      %153 = vsyncadd [#allocation3], %s152
      %s155 = sshll.u32 [#allocation2], 4
      %s156 = int_to_ptr.vmem [resolvable:$true] %s155
      %158 = dma.vmem_to_hbm [thread:$0]  %s156, 128, %s4, [#allocation3]
    $region21: #{tpu_custom_call.1} parent=1 // pred_fallthru
      _
    // Predicated region
    $region22: #{tpu_custom_call.1} parent=1 // pred_check
      _
    $region23: #{tpu_custom_call.1} parent=1 // pred_check_branch
      %160 = sbr.rel (0) target = $region25
    $region24: #{tpu_custom_call.1} parent=1 // pred_region
      %161 = dma.done [#allocation3], 128
    $region25: #{tpu_custom_call.1} parent=1 // pred_fallthru
      _
    %162 = vsyncpa [#allocation3], 1

</llo_original>
